<compile_context>
chip_gen: v6e
topology: v6e:2x2x1
jax: 0.10.0
libtpu: 0.0.40
codegen_flags: <defaults>
</compile_context>

<pallas_src>
import functools

import jax
import jax.numpy as jnp
from jax import lax
from jax.experimental import pallas as pl
from jax.experimental.pallas import tpu as pltpu

E_LAMBDA = 1e-4   # simam_module default
BN_EPS = 1e-5     # nn.BatchNorm2d default


# --------------------------- kernel-side helpers ---------------------------

def _simam_rows(x, n):
    # x: (rows, HW); SimAM statistics per row (== per (branch, channel)).
    mu = jnp.mean(x, axis=-1, keepdims=True)
    xm2 = (x - mu) ** 2
    denom = 4.0 * (jnp.sum(xm2, axis=-1, keepdims=True) / n + E_LAMBDA)
    y = xm2 / denom + 0.5
    return x * jax.nn.sigmoid(y)


def _avg_pool3x3_flat(x, width):
    # x: (rows, H*W), row-major flattened spatial dims.
    # nn.AvgPool2d((3,3), stride=1, padding=1): zero pad, count_include_pad=True
    # -> always divide by 9.  Shifts are done with pltpu.roll (XLU) along the
    # lane axis; wrap-around contributions are masked out with single-row
    # boundary masks that broadcast across all (branch, channel) rows.
    _, hw = x.shape
    pos = lax.broadcasted_iota(jnp.int32, (1, hw), 1)
    col = pos % width
    has_up = pos >= width            # row above exists
    has_down = pos < hw - width      # row below exists
    has_left = col > 0               # column to the left exists
    has_right = col < width - 1      # column to the right exists

    # Vertical neighbours: shift by +-width within the flattened axis.
    up = jnp.where(has_up, pltpu.roll(x, shift=width, axis=1), 0.0)
    down = jnp.where(has_down, pltpu.roll(x, shift=hw - width, axis=1), 0.0)
    vert = x + up + down
    # Horizontal neighbours applied to the vertical partial sums: shift by +-1.
    left = jnp.where(has_left, pltpu.roll(vert, shift=1, axis=1), 0.0)
    right = jnp.where(has_right, pltpu.roll(vert, shift=hw - 1, axis=1), 0.0)
    return (vert + left + right) * (1.0 / 9.0)


# --------------------------------- kernel ----------------------------------

def cbm_kernel(x_ref, w_ref, b_ref, o_ref, *, width):
    # x_ref: (1, 2C, HW)  -- branch-1 channels stacked on top of branch-2.
    # w_ref: (2C, 2C) block-diagonal 1x1-conv weights (BN folded), VMEM.
    # b_ref: (2C, 1) folded biases, VMEM.
    x = x_ref[0].astype(jnp.float32)              # (2C, HW)
    two_c, hw = x.shape
    c = two_c // 2
    n = float(hw - 1)

    # diff_moudel stage 1 for both branches at once: simam + edge extraction.
    xs = _simam_rows(x, n)                        # (2C, HW)
    edge = xs - _avg_pool3x3_flat(xs, width)      # (2C, HW)

    # 1x1 conv + folded BatchNorm for both branches as one matmul (MXU).
    conv = jnp.dot(w_ref[...], edge, preferred_element_type=jnp.float32) + b_ref[...]
    gate = jax.nn.sigmoid(conv)

    # Residual gate + second simam (still fused over both branches).
    out = _simam_rows(gate * xs + xs, n)          # (2C, HW)

    # |d1 - d2| followed by the final simam.
    d = jnp.abs(out[:c, :] - out[c:, :])          # (C, HW)
    o_ref[0] = _simam_rows(d, n).astype(o_ref.dtype)


# --------------------------------- wrapper ----------------------------------

def _fold_bn(w, b, bn):
    # Fold eval-mode BatchNorm2d into the preceding 1x1 conv.
    gamma, beta, mean, var = bn
    scale = gamma / jnp.sqrt(var + BN_EPS)
    wf = (w * scale[:, None]).astype(jnp.float32)
    bf = (scale * (b - mean) + beta).astype(jnp.float32)
    return wf, bf


def cbm_forward(x1, x2, w1, b1, bn1, w2, b2, bn2):
    B, C, H, W = x1.shape
    HW = H * W
    w1f, b1f = _fold_bn(w1, b1, bn1)
    w2f, b2f = _fold_bn(w2, b2, bn2)

    # Block-diagonal weights so both branch convs become one matmul.
    w_blk = jnp.zeros((2 * C, 2 * C), jnp.float32)
    w_blk = w_blk.at[:C, :C].set(w1f).at[C:, C:].set(w2f)
    b_blk = jnp.concatenate([b1f, b2f]).reshape(2 * C, 1)

    # Stack branches along channels and flatten spatial dims -> lane-dense.
    x_cat = jnp.concatenate([x1, x2], axis=1).reshape(B, 2 * C, HW).astype(jnp.float32)

    kernel = functools.partial(cbm_kernel, width=W)

    elem = 2 * C * HW
    cost = pl.CostEstimate(
        flops=int(B * (60 * elem + 2 * (2 * C) * (2 * C) * HW)),
        transcendentals=int(B * 4 * elem),
        bytes_accessed=int((3 * B * C * HW + (2 * C) * (2 * C) + 2 * C) * 4),
    )

    out_flat = pl.pallas_call(
        kernel,
        out_shape=jax.ShapeDtypeStruct((B, C, HW), jnp.float32),
        grid=(B,),
        in_specs=[
            pl.BlockSpec((1, 2 * C, HW), lambda b: (b, 0, 0)),   # stacked inputs
            pl.BlockSpec((2 * C, 2 * C), lambda b: (0, 0)),       # weights (VMEM, resident)
            pl.BlockSpec((2 * C, 1), lambda b: (0, 0)),           # biases (VMEM, resident)
        ],
        out_specs=pl.BlockSpec((1, C, HW), lambda b: (b, 0, 0)),
        compiler_params=pltpu.CompilerParams(dimension_semantics=("parallel",)),
        cost_estimate=cost,
    )(x_cat, w_blk, b_blk)

    return out_flat.reshape(B, C, H, W)


# ----------------------- pure-JAX reference (for check) ---------------------

def _simam_ref(x):
    b, c, h, w = x.shape
    n = h * w - 1
    mu = jnp.mean(x, axis=(2, 3), keepdims=True)
    xm2 = (x - mu) ** 2
    y = xm2 / (4.0 * (jnp.sum(xm2, axis=(2, 3), keepdims=True) / n + E_LAMBDA)) + 0.5
    return x * jax.nn.sigmoid(y)


def _avgpool_ref(x):
    B, C, H, W = x.shape
    xp = jnp.pad(x, ((0, 0), (0, 0), (1, 1), (1, 1)))
    total = jnp.zeros_like(x)
    for di in range(3):
        for dj in range(3):
            total = total + xp[:, :, di:di + H, dj:dj + W]
    return total / 9.0


def _diff_ref(x, w, b, bn):
    gamma, beta, mean, var = bn
    xs = _simam_ref(x)
    edge = xs - _avgpool_ref(xs)
    # Exact f32 1x1 conv (broadcast-sum) so the reference has no reduced-precision matmul.
    conv = jnp.sum(w[None, :, :, None, None] * edge[:, None, :, :, :], axis=2) \
        + b[None, :, None, None]
    bnout = (gamma[None, :, None, None]
             * (conv - mean[None, :, None, None])
             / jnp.sqrt(var[None, :, None, None] + BN_EPS)
             + beta[None, :, None, None])
    gate = jax.nn.sigmoid(bnout)
    out = gate * xs + xs
    return _simam_ref(out)


def _cbm_ref(x1, x2, w1, b1, bn1, w2, b2, bn2):
    d1 = _diff_ref(x1, w1, b1, bn1)
    d2 = _diff_ref(x2, w2, b2, bn2)
    return _simam_ref(jnp.abs(d1 - d2))


# ----------------------------------- main ------------------------------------

if __name__ == "__main__":
    B, C, H, W = 2, 4, 16, 16
    key = jax.random.PRNGKey(0)
    k1, k2, k3, k4, k5, k6 = jax.random.split(key, 6)

    x1 = jax.random.normal(k1, (B, C, H, W), jnp.float32)
    x2 = jax.random.normal(k2, (B, C, H, W), jnp.float32)

    # Deterministic synthetic parameters (Conv2d 1x1 weights/biases per branch).
    w1 = 0.1 * jax.random.normal(k3, (C, C), jnp.float32)
    b1 = 0.1 * jax.random.normal(k4, (C,), jnp.float32)
    w2 = 0.1 * jax.random.normal(k5, (C, C), jnp.float32)
    b2 = 0.1 * jax.random.normal(k6, (C,), jnp.float32)
    # BatchNorm2d in eval mode with default stats: gamma=1, beta=0, mean=0, var=1.
    bn1 = (jnp.ones((C,)), jnp.zeros((C,)), jnp.zeros((C,)), jnp.ones((C,)))
    bn2 = (jnp.ones((C,)), jnp.zeros((C,)), jnp.zeros((C,)), jnp.ones((C,)))

    out = jax.block_until_ready(cbm_forward(x1, x2, w1, b1, bn1, w2, b2, bn2))

    ref = _cbm_ref(x1, x2, w1, b1, bn1, w2, b2, bn2)
    assert out.shape == (B, C, H, W)
    max_err = float(jnp.max(jnp.abs(out - ref)))
    # Tolerance covers the MXU precision mode of the in-kernel f32 conv matmul
    # (everything else, including the pool, is exact f32 elementwise math).
    assert max_err < 2e-3, f"max abs error too large: {max_err}"

    print("KERNEL_OK")
</pallas_src>

<mosaic_0001>
module attributes {stable_mosaic.version = 11 : i64} {
  func.func @cbm_kernel(%arg0: i32, %arg1: memref<1x8x256xf32, #tpu.memory_space<vmem>>, %arg2: memref<8x8xf32, #tpu.memory_space<vmem>>, %arg3: memref<8x1xf32, #tpu.memory_space<vmem>>, %arg4: memref<1x4x256xf32, #tpu.memory_space<vmem>>) attributes {dimension_semantics = [#tpu.dimension_semantics<parallel>], iteration_bounds = array<i64: 2>, scalar_prefetch = 0 : i64, scratch_operands = 0 : i64, tpu.core_type = #tpu.core_type<tc>, window_params = [{transform_indices = @transform_0, window_bounds = array<i64: 1, 8, 256>}, {pipeline_mode = #tpu.pipeline_mode<synchronous>, transform_indices = @transform_1, window_bounds = array<i64: 8, 8>}, {pipeline_mode = #tpu.pipeline_mode<synchronous>, transform_indices = @transform_2, window_bounds = array<i64: 8, 1>}, {transform_indices = @transform_3, window_bounds = array<i64: 1, 4, 256>}]} {
    %c0 = arith.constant 0 : index
    %c0_0 = arith.constant 0 : index
    %c0_1 = arith.constant 0 : index
    %0 = vector.load %arg1[%c0, %c0_0, %c0_1] : memref<1x8x256xf32, #tpu.memory_space<vmem>>, vector<1x8x256xf32>
    %1 = vector.shape_cast %0 : vector<1x8x256xf32> to vector<8x256xf32>
    %cst = arith.constant dense<0.000000e+00> : vector<8xf32>
    %2 = vector.multi_reduction <add>, %1, %cst [1] : vector<8x256xf32> to vector<8xf32>
    %3 = vector.shape_cast %2 : vector<8xf32> to vector<8x1xf32>
    %cst_2 = arith.constant 2.560000e+02 : f32
    %4 = vector.broadcast %cst_2 : f32 to vector<8x1xf32>
    %5 = arith.divf %3, %4 : vector<8x1xf32>
    %6 = vector.broadcast %5 : vector<8x1xf32> to vector<8x256xf32>
    %7 = arith.subf %1, %6 : vector<8x256xf32>
    %8 = arith.mulf %7, %7 : vector<8x256xf32>
    %cst_3 = arith.constant dense<0.000000e+00> : vector<8xf32>
    %9 = vector.multi_reduction <add>, %8, %cst_3 [1] : vector<8x256xf32> to vector<8xf32>
    %10 = vector.shape_cast %9 : vector<8xf32> to vector<8x1xf32>
    %cst_4 = arith.constant 2.550000e+02 : f32
    %11 = vector.broadcast %cst_4 : f32 to vector<8x1xf32>
    %12 = arith.divf %10, %11 : vector<8x1xf32>
    %cst_5 = arith.constant 9.99999974E-5 : f32
    %13 = vector.broadcast %cst_5 : f32 to vector<8x1xf32>
    %14 = arith.addf %12, %13 : vector<8x1xf32>
    %cst_6 = arith.constant 4.000000e+00 : f32
    %15 = vector.broadcast %cst_6 : f32 to vector<8x1xf32>
    %16 = arith.mulf %15, %14 : vector<8x1xf32>
    %17 = vector.broadcast %16 : vector<8x1xf32> to vector<8x256xf32>
    %18 = arith.divf %8, %17 : vector<8x256xf32>
    %cst_7 = arith.constant 5.000000e-01 : f32
    %19 = vector.broadcast %cst_7 : f32 to vector<8x256xf32>
    %20 = arith.addf %18, %19 : vector<8x256xf32>
    %21 = arith.negf %20 : vector<8x256xf32>
    %22 = math.exp %21 : vector<8x256xf32>
    %cst_8 = arith.constant 1.000000e+00 : f32
    %23 = vector.broadcast %cst_8 : f32 to vector<8x256xf32>
    %24 = arith.addf %23, %22 : vector<8x256xf32>
    %25 = arith.divf %23, %24 : vector<8x256xf32>
    %26 = arith.mulf %1, %25 : vector<8x256xf32>
    %27 = tpu.iota {dimensions = array<i32: 1>} : vector<1x256xi32>
    %c16_i32 = arith.constant 16 : i32
    %c0_i32 = arith.constant 0 : i32
    %28 = arith.cmpi eq, %c16_i32, %c0_i32 : i32
    %c1_i32 = arith.constant 1 : i32
    %29 = arith.select %28, %c1_i32, %c16_i32 : i32
    %30 = vector.broadcast %29 : i32 to vector<1x256xi32>
    %31 = arith.remsi %27, %30 : vector<1x256xi32>
    %c0_i32_9 = arith.constant 0 : i32
    %32 = vector.broadcast %c0_i32_9 : i32 to vector<1x256xi32>
    %33 = arith.cmpi ne, %31, %32 : vector<1x256xi32>
    %c0_i32_10 = arith.constant 0 : i32
    %34 = vector.broadcast %c0_i32_10 : i32 to vector<1x256xi32>
    %35 = arith.cmpi slt, %31, %34 : vector<1x256xi32>
    %c0_i32_11 = arith.constant 0 : i32
    %36 = arith.cmpi slt, %29, %c0_i32_11 : i32
    %37 = vector.broadcast %36 : i1 to vector<1x256xi1>
    %38 = vector.broadcast %37 : vector<1x256xi1> to vector<1x256xi1>
    %39 = arith.xori %35, %38 : vector<1x256xi1>
    %40 = arith.andi %39, %33 : vector<1x256xi1>
    %41 = vector.broadcast %29 : i32 to vector<1x256xi32>
    %42 = arith.addi %31, %41 : vector<1x256xi32>
    %43 = arith.select %40, %42, %31 : vector<1x256xi1>, vector<1x256xi32>
    %c16_i32_12 = arith.constant 16 : i32
    %44 = vector.broadcast %c16_i32_12 : i32 to vector<1x256xi32>
    %45 = arith.cmpi sge, %27, %44 : vector<1x256xi32>
    %c240_i32 = arith.constant 240 : i32
    %46 = vector.broadcast %c240_i32 : i32 to vector<1x256xi32>
    %47 = arith.cmpi slt, %27, %46 : vector<1x256xi32>
    %c0_i32_13 = arith.constant 0 : i32
    %48 = vector.broadcast %c0_i32_13 : i32 to vector<1x256xi32>
    %49 = arith.cmpi sgt, %43, %48 : vector<1x256xi32>
    %c15_i32 = arith.constant 15 : i32
    %50 = vector.broadcast %c15_i32 : i32 to vector<1x256xi32>
    %51 = arith.cmpi slt, %43, %50 : vector<1x256xi32>
    %c16_i32_14 = arith.constant 16 : i32
    %52 = tpu.dynamic_rotate %26 by %c16_i32_14 dim 1 : vector<8x256xf32>, i32 -> vector<8x256xf32>
    %cst_15 = arith.constant 0.000000e+00 : f32
    %53 = vector.shape_cast %45 : vector<1x256xi1> to vector<1x256xi1>
    %54 = vector.broadcast %53 : vector<1x256xi1> to vector<8x256xi1>
    %55 = vector.broadcast %cst_15 : f32 to vector<8x256xf32>
    %56 = arith.select %54, %52, %55 : vector<8x256xi1>, vector<8x256xf32>
    %c240_i32_16 = arith.constant 240 : i32
    %57 = tpu.dynamic_rotate %26 by %c240_i32_16 dim 1 : vector<8x256xf32>, i32 -> vector<8x256xf32>
    %cst_17 = arith.constant 0.000000e+00 : f32
    %58 = vector.shape_cast %47 : vector<1x256xi1> to vector<1x256xi1>
    %59 = vector.broadcast %58 : vector<1x256xi1> to vector<8x256xi1>
    %60 = vector.broadcast %cst_17 : f32 to vector<8x256xf32>
    %61 = arith.select %59, %57, %60 : vector<8x256xi1>, vector<8x256xf32>
    %62 = arith.addf %26, %56 : vector<8x256xf32>
    %63 = arith.addf %62, %61 : vector<8x256xf32>
    %c1_i32_18 = arith.constant 1 : i32
    %64 = tpu.dynamic_rotate %63 by %c1_i32_18 dim 1 : vector<8x256xf32>, i32 -> vector<8x256xf32>
    %cst_19 = arith.constant 0.000000e+00 : f32
    %65 = vector.shape_cast %49 : vector<1x256xi1> to vector<1x256xi1>
    %66 = vector.broadcast %65 : vector<1x256xi1> to vector<8x256xi1>
    %67 = vector.broadcast %cst_19 : f32 to vector<8x256xf32>
    %68 = arith.select %66, %64, %67 : vector<8x256xi1>, vector<8x256xf32>
    %c255_i32 = arith.constant 255 : i32
    %69 = tpu.dynamic_rotate %63 by %c255_i32 dim 1 : vector<8x256xf32>, i32 -> vector<8x256xf32>
    %cst_20 = arith.constant 0.000000e+00 : f32
    %70 = vector.shape_cast %51 : vector<1x256xi1> to vector<1x256xi1>
    %71 = vector.broadcast %70 : vector<1x256xi1> to vector<8x256xi1>
    %72 = vector.broadcast %cst_20 : f32 to vector<8x256xf32>
    %73 = arith.select %71, %69, %72 : vector<8x256xi1>, vector<8x256xf32>
    %74 = arith.addf %63, %68 : vector<8x256xf32>
    %75 = arith.addf %74, %73 : vector<8x256xf32>
    %cst_21 = arith.constant 0.111111112 : f32
    %76 = vector.broadcast %cst_21 : f32 to vector<8x256xf32>
    %77 = arith.mulf %75, %76 : vector<8x256xf32>
    %78 = arith.subf %26, %77 : vector<8x256xf32>
    %c0_22 = arith.constant 0 : index
    %c0_23 = arith.constant 0 : index
    %79 = vector.load %arg2[%c0_22, %c0_23] : memref<8x8xf32, #tpu.memory_space<vmem>>, vector<8x8xf32>
    %cst_24 = arith.constant dense<0.000000e+00> : vector<8x256xf32>
    %80 = tpu.matmul %79, %78, %cst_24 {dimension_numbers = #tpu.dot_dimension_numbers<[1], [0], [0], [1], [0, 0, 1, 1], [], []>} : vector<8x8xf32>, vector<8x256xf32>, vector<8x256xf32> -> vector<8x256xf32>
    %c0_25 = arith.constant 0 : index
    %c0_26 = arith.constant 0 : index
    %81 = vector.load %arg3[%c0_25, %c0_26] : memref<8x1xf32, #tpu.memory_space<vmem>>, vector<8x1xf32>
    %82 = vector.broadcast %81 : vector<8x1xf32> to vector<8x256xf32>
    %83 = arith.addf %80, %82 : vector<8x256xf32>
    %84 = arith.negf %83 : vector<8x256xf32>
    %85 = math.exp %84 : vector<8x256xf32>
    %cst_27 = arith.constant 1.000000e+00 : f32
    %86 = vector.broadcast %cst_27 : f32 to vector<8x256xf32>
    %87 = arith.addf %86, %85 : vector<8x256xf32>
    %88 = arith.divf %86, %87 : vector<8x256xf32>
    %89 = arith.mulf %88, %26 : vector<8x256xf32>
    %90 = arith.addf %89, %26 : vector<8x256xf32>
    %cst_28 = arith.constant dense<0.000000e+00> : vector<8xf32>
    %91 = vector.multi_reduction <add>, %90, %cst_28 [1] : vector<8x256xf32> to vector<8xf32>
    %92 = vector.shape_cast %91 : vector<8xf32> to vector<8x1xf32>
    %cst_29 = arith.constant 2.560000e+02 : f32
    %93 = vector.broadcast %cst_29 : f32 to vector<8x1xf32>
    %94 = arith.divf %92, %93 : vector<8x1xf32>
    %95 = vector.broadcast %94 : vector<8x1xf32> to vector<8x256xf32>
    %96 = arith.subf %90, %95 : vector<8x256xf32>
    %97 = arith.mulf %96, %96 : vector<8x256xf32>
    %cst_30 = arith.constant dense<0.000000e+00> : vector<8xf32>
    %98 = vector.multi_reduction <add>, %97, %cst_30 [1] : vector<8x256xf32> to vector<8xf32>
    %99 = vector.shape_cast %98 : vector<8xf32> to vector<8x1xf32>
    %cst_31 = arith.constant 2.550000e+02 : f32
    %100 = vector.broadcast %cst_31 : f32 to vector<8x1xf32>
    %101 = arith.divf %99, %100 : vector<8x1xf32>
    %cst_32 = arith.constant 9.99999974E-5 : f32
    %102 = vector.broadcast %cst_32 : f32 to vector<8x1xf32>
    %103 = arith.addf %101, %102 : vector<8x1xf32>
    %cst_33 = arith.constant 4.000000e+00 : f32
    %104 = vector.broadcast %cst_33 : f32 to vector<8x1xf32>
    %105 = arith.mulf %104, %103 : vector<8x1xf32>
    %106 = vector.broadcast %105 : vector<8x1xf32> to vector<8x256xf32>
    %107 = arith.divf %97, %106 : vector<8x256xf32>
    %cst_34 = arith.constant 5.000000e-01 : f32
    %108 = vector.broadcast %cst_34 : f32 to vector<8x256xf32>
    %109 = arith.addf %107, %108 : vector<8x256xf32>
    %110 = arith.negf %109 : vector<8x256xf32>
    %111 = math.exp %110 : vector<8x256xf32>
    %cst_35 = arith.constant 1.000000e+00 : f32
    %112 = vector.broadcast %cst_35 : f32 to vector<8x256xf32>
    %113 = arith.addf %112, %111 : vector<8x256xf32>
    %114 = arith.divf %112, %113 : vector<8x256xf32>
    %115 = arith.mulf %90, %114 : vector<8x256xf32>
    %116 = vector.extract_strided_slice %115 {offsets = [0, 0], sizes = [4, 256], strides = [1, 1]} : vector<8x256xf32> to vector<4x256xf32>
    %117 = vector.extract_strided_slice %115 {offsets = [4, 0], sizes = [4, 256], strides = [1, 1]} : vector<8x256xf32> to vector<4x256xf32>
    %118 = arith.subf %116, %117 : vector<4x256xf32>
    %119 = math.absf %118 : vector<4x256xf32>
    %cst_36 = arith.constant dense<0.000000e+00> : vector<4xf32>
    %120 = vector.multi_reduction <add>, %119, %cst_36 [1] : vector<4x256xf32> to vector<4xf32>
    %121 = vector.shape_cast %120 : vector<4xf32> to vector<4x1xf32>
    %cst_37 = arith.constant 2.560000e+02 : f32
    %122 = vector.broadcast %cst_37 : f32 to vector<4x1xf32>
    %123 = arith.divf %121, %122 : vector<4x1xf32>
    %124 = vector.broadcast %123 : vector<4x1xf32> to vector<4x256xf32>
    %125 = arith.subf %119, %124 : vector<4x256xf32>
    %126 = arith.mulf %125, %125 : vector<4x256xf32>
    %cst_38 = arith.constant dense<0.000000e+00> : vector<4xf32>
    %127 = vector.multi_reduction <add>, %126, %cst_38 [1] : vector<4x256xf32> to vector<4xf32>
    %128 = vector.shape_cast %127 : vector<4xf32> to vector<4x1xf32>
    %cst_39 = arith.constant 2.550000e+02 : f32
    %129 = vector.broadcast %cst_39 : f32 to vector<4x1xf32>
    %130 = arith.divf %128, %129 : vector<4x1xf32>
    %cst_40 = arith.constant 9.99999974E-5 : f32
    %131 = vector.broadcast %cst_40 : f32 to vector<4x1xf32>
    %132 = arith.addf %130, %131 : vector<4x1xf32>
    %cst_41 = arith.constant 4.000000e+00 : f32
    %133 = vector.broadcast %cst_41 : f32 to vector<4x1xf32>
    %134 = arith.mulf %133, %132 : vector<4x1xf32>
    %135 = vector.broadcast %134 : vector<4x1xf32> to vector<4x256xf32>
    %136 = arith.divf %126, %135 : vector<4x256xf32>
    %cst_42 = arith.constant 5.000000e-01 : f32
    %137 = vector.broadcast %cst_42 : f32 to vector<4x256xf32>
    %138 = arith.addf %136, %137 : vector<4x256xf32>
    %139 = arith.negf %138 : vector<4x256xf32>
    %140 = math.exp %139 : vector<4x256xf32>
    %cst_43 = arith.constant 1.000000e+00 : f32
    %141 = vector.broadcast %cst_43 : f32 to vector<4x256xf32>
    %142 = arith.addf %141, %140 : vector<4x256xf32>
    %143 = arith.divf %141, %142 : vector<4x256xf32>
    %144 = arith.mulf %119, %143 : vector<4x256xf32>
    %c0_44 = arith.constant 0 : index
    %c0_45 = arith.constant 0 : index
    %c0_46 = arith.constant 0 : index
    %145 = vector.load %arg4[%c0_44, %c0_45, %c0_46] : memref<1x4x256xf32, #tpu.memory_space<vmem>>, vector<1x4x256xf32>
    %146 = vector.shape_cast %145 : vector<1x4x256xf32> to vector<4x256xf32>
    %147 = vector.shape_cast %144 : vector<4x256xf32> to vector<1x4x256xf32>
    tpu.vector_store %arg4[%c0_44, %c0_45, %c0_46], %147 {strides = array<i32>} : memref<1x4x256xf32, #tpu.memory_space<vmem>>, vector<1x4x256xf32>,
    return
  }
  func.func @transform_0(%arg0: i32) -> (i32, i32, i32) {
    %c0_i32 = arith.constant 0 : i32
    %c0_i32_0 = arith.constant 0 : i32
    %c0_i32_1 = arith.constant 0 : i32
    return %arg0, %c0_i32, %c0_i32_0 : i32, i32, i32
  }
  func.func @transform_1(%arg0: i32) -> (i32, i32) {
    %c0_i32 = arith.constant 0 : i32
    %c0_i32_0 = arith.constant 0 : i32
    %c0_i32_1 = arith.constant 0 : i32
    return %c0_i32, %c0_i32_0 : i32, i32
  }
  func.func @transform_2(%arg0: i32) -> (i32, i32) {
    %c0_i32 = arith.constant 0 : i32
    %c0_i32_0 = arith.constant 0 : i32
    %c0_i32_1 = arith.constant 0 : i32
    return %c0_i32, %c0_i32_0 : i32, i32
  }
  func.func @transform_3(%arg0: i32) -> (i32, i32, i32) {
    %c0_i32 = arith.constant 0 : i32
    %c0_i32_0 = arith.constant 0 : i32
    %c0_i32_1 = arith.constant 0 : i32
    return %arg0, %c0_i32, %c0_i32_0 : i32, i32, i32
  }
}

</mosaic_0001>

<llo_original>
// kernel: tpu_custom_call.1
$region0: #{tpu_custom_call.1}
  #allocation0 [shape = 'u32[]', space=smem, size = 0x4, offset = 0x4, fixed_abs, tag = 'smem constant byte address 0x4 - core index']
  #allocation1 [shape = 'u32[144,128]{1,0:T(1,128)}', space=vmem, size = 0x12000, scoped, tag = 'internal scratch']
  %s0 = inlined_call_operand.hbm [shape: f32[2,8,256], index: 0, kind: input, shape index: {}]
  %s1 = inlined_call_operand.vmem [shape: f32[8,8], index: 1, kind: input, shape index: {}]
  %s2 = inlined_call_operand.vmem [shape: f32[8,1], index: 2, kind: input, shape index: {}]
  %s3 = inlined_call_operand.hbm [shape: f32[2,4,256], index: 3, kind: output, shape index: {}]
  %s4 = sld [smem:[#allocation0]]
  $region49: #{tpu_custom_call.1} parent=0
    _
  %s6 = ssub.s32 1, %s4
  %s7 = scalar_select 0, %s6, %s4
  $region1: #{tpu_custom_call.1} parent=0
    #allocation2 [shape = 'u8[16384]{0}', space=vmem, size = 0x4000, scoped, tag = 'input window, operand 0']
    #allocation3 [shape = 's32[2]{0}', space=sflag, size = 0x8, scoped, tag = 'scoped memory for tpu_custom_call.1']
    #allocation4 [shape = 's32[2]{0}', space=sflag, size = 0x8, scoped, tag = 'scoped memory for tpu_custom_call.1']
    #allocation5 [shape = 'u8[8192]{0}', space=vmem, size = 0x2000, scoped, tag = 'output window, operand 0']
    %8 = vsyncpa [#allocation3], 0
    %s9 = scalar_lea.sflag [#allocation3], 1
    %10 = vsyncpa %s9, 0
    %11 = vsyncpa [#allocation4], 0
    %s12 = scalar_lea.sflag [#allocation4], 1
    %13 = vsyncpa %s12, 0
    loop: start=0, step=1, limit=4
    $region2: #{tpu_custom_call.1} parent=1 // loop_pre_header
      _
    $region3: #{tpu_custom_call.1} parent=1 // loop_header
      %s15 = sphi 0, %s19
      %p16 = scmp.ge.s32.totalorder %s15, 4
      %s25 = sphi 0, %s27
      %s28 = sphi 0, %s25
      %s29 = sphi 0, %s28
      %s45 = sphi 0, %s29
      %s49 = sphi 0, %s49
      %s51 = sphi 0, %s49
      %s52 = sphi 0, %s51
      %s66 = sphi 0, %s52
      %s70 = sphi 0, %s70
      %s72 = sphi 0, %s70
      %s73 = sphi 0, %s72
      %s87 = sphi 0, %s73
      %s93 = sphi 0, %s95
      %s96 = sphi 0, %s93
      %s97 = sphi 0, %s96
      %s113 = sphi 0, %s97
    $region4: #{tpu_custom_call.1} parent=1 // loop_header_branch
      %18 = sbr.rel (%p16) target = $region8
    $region5: #{tpu_custom_call.1} parent=1 // loop_body
      %s20 = ssub.s32 %s15, 1
      %s21 = ssub.s32 %s15, 2
      %s22 = sadd.s32 %s15, 1
      %s23 = ssub.s32 %s15, %s22
      %p24 = scmp.eq.s32.totalorder %s23, 0
      %s26 = sadd.s32 %s25, 1
      %s27 = scalar_select %p24, %s25, %s26
      %p30 = pneg %p24
      %p31 = scmp.eq.s32.totalorder %s15, 1
      %p32 = por %p30, %p31
      %p33 = scmp.ne.s32.totalorder %s25, %s28
      %p34 = scmp.eq.s32.totalorder %s15, 0
      %p35 = por %p33, %p34
      %p36 = scmp.ne.s32.totalorder %s25, %s28
      %p37 = scmp.eq.s32.totalorder %s20, 1
      %p38 = por %p36, %p37
      %p39 = scmp.ne.s32.totalorder %s28, %s29
      %p40 = scmp.eq.s32.totalorder %s20, 0
      %p41 = por %p39, %p40
      %p42 = scmp.ne.s32.totalorder %s28, %s29
      %p43 = scmp.eq.s32.totalorder %s21, 1
      %p44 = por %p42, %p43
      %p46 = scmp.ne.s32.totalorder %s29, %s45
      %p47 = scmp.eq.s32.totalorder %s21, 0
      %p48 = por %p46, %p47
      %s50 = sadd.s32 %s49, 1
      %p53 = scmp.eq.s32.totalorder %s15, 1
      %p54 = scmp.ne.s32.totalorder %s49, %s51
      %p55 = scmp.eq.s32.totalorder %s15, 0
      %p56 = por %p54, %p55
      %p57 = scmp.ne.s32.totalorder %s49, %s51
      %p58 = scmp.eq.s32.totalorder %s20, 1
      %p59 = por %p57, %p58
      %p60 = scmp.ne.s32.totalorder %s51, %s52
      %p61 = scmp.eq.s32.totalorder %s20, 0
      %p62 = por %p60, %p61
      %p63 = scmp.ne.s32.totalorder %s51, %s52
      %p64 = scmp.eq.s32.totalorder %s21, 1
      %p65 = por %p63, %p64
      %p67 = scmp.ne.s32.totalorder %s52, %s66
      %p68 = scmp.eq.s32.totalorder %s21, 0
      %p69 = por %p67, %p68
      %s71 = sadd.s32 %s70, 1
      %p74 = scmp.eq.s32.totalorder %s15, 1
      %p75 = scmp.ne.s32.totalorder %s70, %s72
      %p76 = scmp.eq.s32.totalorder %s15, 0
      %p77 = por %p75, %p76
      %p78 = scmp.ne.s32.totalorder %s70, %s72
      %p79 = scmp.eq.s32.totalorder %s20, 1
      %p80 = por %p78, %p79
      %p81 = scmp.ne.s32.totalorder %s72, %s73
      %p82 = scmp.eq.s32.totalorder %s20, 0
      %p83 = por %p81, %p82
      %p84 = scmp.ne.s32.totalorder %s72, %s73
      %p85 = scmp.eq.s32.totalorder %s21, 1
      %p86 = por %p84, %p85
      %p88 = scmp.ne.s32.totalorder %s73, %s87
      %p89 = scmp.eq.s32.totalorder %s21, 0
      %p90 = por %p88, %p89
      %s91 = ssub.s32 %s15, %s22
      %p92 = scmp.eq.s32.totalorder %s91, 0
      %s94 = sadd.s32 %s93, 1
      %s95 = scalar_select %p92, %s93, %s94
      %p98 = pneg %p92
      %p99 = scmp.eq.s32.totalorder %s15, 1
      %p100 = por %p98, %p99
      %p101 = scmp.ne.s32.totalorder %s93, %s96
      %p102 = scmp.eq.s32.totalorder %s15, 0
      %p103 = por %p101, %p102
      %p104 = scmp.ne.s32.totalorder %s93, %s96
      %p105 = scmp.eq.s32.totalorder %s20, 1
      %p106 = por %p104, %p105
      %p107 = scmp.ne.s32.totalorder %s96, %s97
      %p108 = scmp.eq.s32.totalorder %s20, 0
      %p109 = por %p107, %p108
      %p110 = scmp.ne.s32.totalorder %s96, %s97
      %p111 = scmp.eq.s32.totalorder %s21, 1
      %p112 = por %p110, %p111
      %p114 = scmp.ne.s32.totalorder %s97, %s113
      %p115 = scmp.eq.s32.totalorder %s21, 0
      %p116 = por %p114, %p115
      %p117 = scmp.le.s32.totalorder 1, %s15
      %p118 = scmp.lt.s32.totalorder %s15, 3
      %p119 = pnand %p117, %p118
      %p120 = pneg %p119
      // Predicated region
      $region9: #{tpu_custom_call.1} parent=5 // pred_check
        _
      $region10: #{tpu_custom_call.1} parent=5 // pred_check_branch
        %122 = sbr.rel (%p119) target = $region12
      $region11: #{tpu_custom_call.1} parent=5 // pred_region
        %s123 = ssub.s32 %s15, 1
        // Predicated region
        $region13: #{tpu_custom_call.1} parent=11 // pred_check
          %p124 = pneg %p62
        $region14: #{tpu_custom_call.1} parent=11 // pred_check_branch
          %126 = sbr.rel (%p124) target = $region16
        $region15: #{tpu_custom_call.1} parent=11 // pred_region
          _
        $region16: #{tpu_custom_call.1} parent=11 // pred_fallthru
          _
        // Predicated region
        $region17: #{tpu_custom_call.1} parent=11 // pred_check
          %p127 = pneg %p83
        $region18: #{tpu_custom_call.1} parent=11 // pred_check_branch
          %129 = sbr.rel (%p127) target = $region20
        $region19: #{tpu_custom_call.1} parent=11 // pred_region
          _
        $region20: #{tpu_custom_call.1} parent=11 // pred_fallthru
          _
      $region12: #{tpu_custom_call.1} parent=5 // pred_fallthru
        _
      %p130 = scmp.lt.s32.totalorder %s15, 2
      // Predicated region
      $region21: #{tpu_custom_call.1} parent=5 // pred_check
        %p131 = pneg %p130
      $region22: #{tpu_custom_call.1} parent=5 // pred_check_branch
        %133 = sbr.rel (%p131) target = $region24
      $region23: #{tpu_custom_call.1} parent=5 // pred_region
        // Predicated region
        $region25: #{tpu_custom_call.1} parent=23 // pred_check
          %p134 = pneg %p35
        $region26: #{tpu_custom_call.1} parent=23 // pred_check_branch
          %136 = sbr.rel (%p134) target = $region28
        $region27: #{tpu_custom_call.1} parent=23 // pred_region
          %s137 = sand.u32 %s25, 1
          %s138 = scalar_lea.sflag [#allocation3], %s137
          %s139 = sand.u32 %s25, 1
          %s140 = smul.addr %s139, 16
          %s141 = scalar_lea.vmem [#allocation2], %s140
          %s143 = ssub.s32 256, 256
          %144 = vsyncadd %s138, %s143
          %s145 = smul.addr %s15, 2
          %s146 = smul.addr %s145, 128
          %s147 = scalar_lea.hbm %s0, %s146
          %s149 = sshll.u32 %s141, 4
          %s150 = int_to_ptr.vmem [resolvable:$true] %s149
          %152 = dma.hbm_to_vmem [thread:$0]  %s147, 256, %s150, %s138
        $region28: #{tpu_custom_call.1} parent=23 // pred_fallthru
          _
      $region24: #{tpu_custom_call.1} parent=5 // pred_fallthru
        _
      %p153 = scmp.le.s32.totalorder 1, %s15
      %p154 = scmp.lt.s32.totalorder %s15, 3
      %p155 = pnand %p153, %p154
      %p156 = pneg %p155
      // Predicated region
      $region29: #{tpu_custom_call.1} parent=5 // pred_check
        _
      $region30: #{tpu_custom_call.1} parent=5 // pred_check_branch
        %158 = sbr.rel (%p155) target = $region32
      $region31: #{tpu_custom_call.1} parent=5 // pred_region
        %s159 = ssub.s32 %s15, 1
        %s160 = sand.u32 %s28, 1
        %s161 = scalar_lea.sflag [#allocation3], %s160
        %s162 = sand.u32 %s28, 1
        %s163 = smul.addr %s162, 16
        %s164 = scalar_lea.vmem [#allocation2], %s163
        // Predicated region
        $region33: #{tpu_custom_call.1} parent=31 // pred_check
          %p165 = pneg %p41
        $region34: #{tpu_custom_call.1} parent=31 // pred_check_branch
          %167 = sbr.rel (%p165) target = $region36
        $region35: #{tpu_custom_call.1} parent=31 // pred_region
          %168 = dma.done %s161, 256
        $region36: #{tpu_custom_call.1} parent=31 // pred_fallthru
          _
        %s169 = sand.u32 %s28, 1
        %s170 = scalar_lea.sflag [#allocation3], %s169
        %s171 = sand.u32 %s28, 1
        %s172 = smul.addr %s171, 16
        %s173 = scalar_lea.vmem [#allocation2], %s172
        %p174 = pneg %p41
        %p175 = pneg %p38
        %p176 = pneg %p62
        %p177 = pneg %p59
        %p178 = pneg %p83
        %p179 = pneg %p80
        %p180 = pneg %p109
        %p181 = pneg %p106
        %s182 = sand.u32 %s96, 1
        %s183 = scalar_lea.sflag [#allocation4], %s182
        %s184 = sand.u32 %s96, 1
        %s185 = smul.addr %s184, 8
        %s186 = scalar_lea.vmem [#allocation5], %s185
        %v187 = vld [vmem:[%s164] sm:$0xff]
        %v188 = vld [vmem:[%s164 + $0x8] sm:$0xff]
        %v189 = vadd.f32 %v187, %v188
        %190 = vadd.xlane.f32.xlu0 %v189
        %v191 = vpop.xlane.xlu0 %190
        %v192 = vrcp.pop 256.0
        %v193 = vmul.f32 %v191, %v192
        %v194 = vsub.f32 %v187, %v193
        %v195 = vsub.f32 %v188, %v193
        %v196 = vmul.f32 %v194, %v194
        %v197 = vmul.f32 %v195, %v195
        %v198 = vadd.f32 %v196, %v197
        %199 = vadd.xlane.f32.xlu0 %v198
        %v200 = vpop.xlane.xlu0 %199
        %v201 = vrcp.pop 255.0
        %v202 = vmul.f32 %v200, %v201
        %v203 = vadd.f32 %v202, 0.0001
        %v204 = vmul.f32 %v203, 4.0
        %v205 = vrcp.pop %v204
        %v206 = vmul.f32 %v196, %v205
        %v207 = vmul.f32 %v197, %v205
        %v208 = vadd.f32 %v206, 0.5
        %v209 = vadd.f32 %v207, 0.5
        %v210 = vxor.u32 %v208, 2147483648
        %v211 = vxor.u32 %v209, 2147483648
        %v212 = vmul.f32 %v210, 1.442695
        %v213 = vpow.pop %v212
        %v214 = vmul.f32 %v211, 1.442695
        %v215 = vpow.pop %v214
        %v216 = vadd.f32 %v213, 1.0
        %v217 = vadd.f32 %v215, 1.0
        %v218 = vrcp.pop %v216
        %v219 = vmul.f32 1.0, %v218
        %v220 = vrcp.pop %v217
        %v221 = vmul.f32 1.0, %v220
        %v222 = vmul.f32 %v187, %v219
        %v223 = vmul.f32 %v188, %v221
        %v224 = vlaneseq
        %v225 = vand.u32 %v224, 127
        %v226 = vadd.s32 %v225, 128
        %vm227 = vcmp.lt.s32.totalorder %v225, 0
        %v228 = vsub.s32 0, %v225
        %v229 = vsel %vm227, %v228, %v225
        %v230 = vshrl.u32 %v229, 4
        %v231 = vand.u32 %v229, 15
        %v232 = vsub.s32 0, %v231
        %v233 = vsel %vm227, %v232, %v231
        %vm234 = vcmp.lt.s32.totalorder %v226, 0
        %v235 = vsub.s32 0, %v226
        %v236 = vsel %vm234, %v235, %v226
        %v237 = vshrl.u32 %v236, 4
        %v238 = vand.u32 %v236, 15
        %v239 = vsub.s32 0, %v238
        %v240 = vsel %vm234, %v239, %v238
        %vm241 = vcmp.ne.s32.totalorder %v233, 0
        %vm242 = vcmp.ne.s32.totalorder %v240, 0
        %vm243 = vcmp.lt.s32.totalorder %v233, 0
        %vm244 = vcmp.lt.s32.totalorder %v240, 0
        %vm245 = vmand %vm243, %vm241
        %vm246 = vmand %vm244, %vm242
        %v247 = vadd.s32 %v233, 16
        %v248 = vadd.s32 %v240, 16
        %v249 = vsel %vm245, %v247, %v233
        %v250 = vsel %vm246, %v248, %v240
        %vm251 = vcmp.ge.s32.totalorder %v225, 16
        %vm252 = vcmp.ge.s32.totalorder %v226, 16
        %vm253 = vcmp.lt.s32.totalorder %v225, 240
        %vm254 = vcmp.lt.s32.totalorder %v226, 240
        %vm255 = vcmp.gt.s32.totalorder %v249, 0
        %vm256 = vcmp.gt.s32.totalorder %v250, 0
        %vm257 = vcmp.lt.s32.totalorder %v249, 15
        %vm258 = vcmp.lt.s32.totalorder %v250, 15
        %259 = vrot.lane.b32.xlu0 %v222, 16
        %v260 = vpop.permute.xlu0 %259
        %261 = vrot.lane.b32.xlu0 %v223, 16
        %v262 = vpop.permute.xlu0 %261
        %vm263 = vcmp.lt.s32.totalorder %v225, 16
        %v264 = vsel %vm263, %v260, %v262
        %v265 = vsel %vm263, %v262, %v260
        %v266 = vsel %vm251, 1, 0
        %v267 = vsel %vm252, 1, 0
        %vm268 = vcmp.eq.s32.totalorder %v266, 1
        %vm269 = vcmp.eq.s32.totalorder %v267, 1
        %v270 = vsel %vm268, %v265, 0.0
        %v271 = vsel %vm269, %v264, 0.0
        %272 = vrot.lane.b32.xlu0 %v222, 112
        %v273 = vpop.permute.xlu0 %272
        %274 = vrot.lane.b32.xlu0 %v223, 112
        %v275 = vpop.permute.xlu0 %274
        %vm276 = vcmp.lt.s32.totalorder %v225, 112
        %v277 = vsel %vm276, %v273, %v275
        %v278 = vsel %vm276, %v275, %v273
        %v279 = vsel %vm253, 1, 0
        %v280 = vsel %vm254, 1, 0
        %vm281 = vcmp.eq.s32.totalorder %v279, 1
        %vm282 = vcmp.eq.s32.totalorder %v280, 1
        %v283 = vsel %vm281, %v277, 0.0
        %v284 = vsel %vm282, %v278, 0.0
        %v285 = vadd.f32 %v222, %v270
        %v286 = vadd.f32 %v223, %v271
        %v287 = vadd.f32 %v285, %v283
        %v288 = vadd.f32 %v286, %v284
        %289 = vrot.lane.b32.xlu0 %v287, 1
        %v290 = vpop.permute.xlu0 %289
        %291 = vrot.lane.b32.xlu0 %v288, 1
        %v292 = vpop.permute.xlu0 %291
        %vm293 = vcmp.lt.s32.totalorder %v225, 1
        %v294 = vsel %vm293, %v290, %v292
        %v295 = vsel %vm293, %v292, %v290
        %v296 = vsel %vm255, 1, 0
        %v297 = vsel %vm256, 1, 0
        %vm298 = vcmp.eq.s32.totalorder %v296, 1
        %vm299 = vcmp.eq.s32.totalorder %v297, 1
        %v300 = vsel %vm298, %v295, 0.0
        %v301 = vsel %vm299, %v294, 0.0
        %302 = vrot.lane.b32.xlu0 %v287, 127
        %v303 = vpop.permute.xlu0 %302
        %304 = vrot.lane.b32.xlu0 %v288, 127
        %v305 = vpop.permute.xlu0 %304
        %vm306 = vcmp.lt.s32.totalorder %v225, 127
        %v307 = vsel %vm306, %v303, %v305
        %v308 = vsel %vm306, %v305, %v303
        %v309 = vsel %vm257, 1, 0
        %v310 = vsel %vm258, 1, 0
        %vm311 = vcmp.eq.s32.totalorder %v309, 1
        %vm312 = vcmp.eq.s32.totalorder %v310, 1
        %v313 = vsel %vm311, %v307, 0.0
        %v314 = vsel %vm312, %v308, 0.0
        %v315 = vadd.f32 %v287, %v300
        %v316 = vadd.f32 %v288, %v301
        %v317 = vadd.f32 %v315, %v313
        %v318 = vadd.f32 %v316, %v314
        %v319 = vmul.f32 %v317, 0.11111111
        %v320 = vmul.f32 %v318, 0.11111111
        %v321 = vsub.f32 %v222, %v319
        %v322 = vsub.f32 %v223, %v320
        %v323 = vld [vmem:[%s1] sm:$0xff]
        %v324 = vld [vmem:[%s2] sm:$0xff]
        %326 = vset.pattern.permute.xlu0 0
        %327 = vperm.xlu0 %326, %v324
        %v328 = vpop.permute.xlu0 %327
        %vm330 = vcmask 64512
        %v332 = vsel %vm330, %v323, 0
        %334 = vmatprep.subr.mxu0 0.0
        %335 = vmatpush1.msra.mxu0 0.0
        %336 = vmatprep.subr.mxu0 0.0
        %337 = vmatpush1.msra.mxu0 0.0
        %338 = vmatprep.subr.mxu0 0.0
        %339 = vmatpush1.msra.mxu0 0.0
        %340 = vmatprep.subr.mxu0 0.0
        %341 = vmatpush1.msra.mxu0 0.0
        %342 = vmatprep.subr.mxu0 0.0
        %343 = vmatpush1.msra.mxu0 0.0
        %344 = vmatprep.subr.mxu0 0.0
        %345 = vmatpush1.msra.mxu0 0.0
        %346 = vmatprep.subr.mxu0 0.0
        %347 = vmatpush1.msra.mxu0 0.0
        %348 = vmatprep.subr.mxu0 0.0
        %349 = vmatpush1.msra.mxu0 0.0
        %350 = vmatprep.subr.mxu0 0.0
        %351 = vmatpush1.msra.mxu0 0.0
        %352 = vmatprep.subr.mxu0 0.0
        %353 = vmatpush1.msra.mxu0 0.0
        %354 = vmatprep.subr.mxu0 0.0
        %355 = vmatpush1.msra.mxu0 0.0
        %356 = vmatprep.subr.mxu0 0.0
        %357 = vmatpush1.msra.mxu0 0.0
        %358 = vmatprep.subr.mxu0 0.0
        %359 = vmatpush1.msra.mxu0 0.0
        %360 = vmatprep.subr.mxu0 0.0
        %361 = vmatpush1.msra.mxu0 0.0
        %362 = vmatprep.subr.mxu0 0.0
        %363 = vmatpush1.msra.mxu0 0.0
        %364 = vmatprep.subr.mxu0 %v322
        %365 = vmatpush1.msra.mxu0 %v321
        %366 = vmatprep.subr.mxu0 0.0
        %367 = vmatpush2.msra.mxu0 0.0
        %368 = vmatprep.subr.mxu0 0.0
        %369 = vmatpush2.msra.mxu0 0.0
        %370 = vmatprep.subr.mxu0 0.0
        %371 = vmatpush2.msra.mxu0 0.0
        %372 = vmatprep.subr.mxu0 0.0
        %373 = vmatpush2.msra.mxu0 0.0
        %374 = vmatprep.subr.mxu0 0.0
        %375 = vmatpush2.msra.mxu0 0.0
        %376 = vmatprep.subr.mxu0 0.0
        %377 = vmatpush2.msra.mxu0 0.0
        %378 = vmatprep.subr.mxu0 0.0
        %379 = vmatpush2.msra.mxu0 0.0
        %380 = vmatprep.subr.mxu0 0.0
        %381 = vmatpush2.msra.mxu0 0.0
        %382 = vmatprep.subr.mxu0 0.0
        %383 = vmatpush2.msra.mxu0 0.0
        %384 = vmatprep.subr.mxu0 0.0
        %385 = vmatpush2.msra.mxu0 0.0
        %386 = vmatprep.subr.mxu0 0.0
        %387 = vmatpush2.msra.mxu0 0.0
        %388 = vmatprep.subr.mxu0 0.0
        %389 = vmatpush2.msra.mxu0 0.0
        %390 = vmatprep.subr.mxu0 0.0
        %391 = vmatpush2.msra.mxu0 0.0
        %392 = vmatprep.subr.mxu0 0.0
        %393 = vmatpush2.msra.mxu0 0.0
        %394 = vmatprep.subr.mxu0 0.0
        %395 = vmatpush2.msra.mxu0 0.0
        %396 = vmatprep.subr.mxu0 0.0
        %397 = vmatpush2.msra.mxu0 0.0
        %398 = vmatprep.mubr.f32.mxu0 0.0
        %399 = vmatmul.mubr.f32.gmra.mxu0 %v332
        %v400 = vpop.f32.mrf.mxu0
        %v401 = vadd.f32 %v328, %v400
        %v402 = vpop.f32.mrf.mxu0
        %v403 = vadd.f32 %v328, %v402
        %404 = vdwg.mxu0
        %v405 = vxor.u32 %v401, 2147483648
        %v406 = vxor.u32 %v403, 2147483648
        %v407 = vmul.f32 %v405, 1.442695
        %v408 = vpow.pop %v407
        %v409 = vmul.f32 %v406, 1.442695
        %v410 = vpow.pop %v409
        %v411 = vadd.f32 %v408, 1.0
        %v412 = vadd.f32 %v410, 1.0
        %v413 = vrcp.pop %v411
        %v414 = vmul.f32 1.0, %v413
        %v415 = vrcp.pop %v412
        %v416 = vmul.f32 1.0, %v415
        %v417 = vmul.f32 %v414, %v222
        %v418 = vmul.f32 %v416, %v223
        %v419 = vadd.f32 %v417, %v222
        %v420 = vadd.f32 %v418, %v223
        %v421 = vadd.f32 %v419, %v420
        %422 = vadd.xlane.f32.xlu0 %v421
        %v423 = vpop.xlane.xlu0 %422
        %v424 = vmul.f32 %v423, %v192
        %v425 = vsub.f32 %v419, %v424
        %v426 = vsub.f32 %v420, %v424
        %v427 = vmul.f32 %v425, %v425
        %v428 = vmul.f32 %v426, %v426
        %v429 = vadd.f32 %v427, %v428
        %430 = vadd.xlane.f32.xlu0 %v429
        %v431 = vpop.xlane.xlu0 %430
        %v432 = vmul.f32 %v431, %v201
        %v433 = vadd.f32 %v432, 0.0001
        %v434 = vmul.f32 %v433, 4.0
        %v435 = vrcp.pop %v434
        %v436 = vmul.f32 %v427, %v435
        %v437 = vmul.f32 %v428, %v435
        %v438 = vadd.f32 %v436, 0.5
        %v439 = vadd.f32 %v437, 0.5
        %v440 = vxor.u32 %v438, 2147483648
        %v441 = vxor.u32 %v439, 2147483648
        %v442 = vmul.f32 %v440, 1.442695
        %v443 = vpow.pop %v442
        %v444 = vmul.f32 %v441, 1.442695
        %v445 = vpow.pop %v444
        %v446 = vadd.f32 %v443, 1.0
        %v447 = vadd.f32 %v445, 1.0
        %v448 = vrcp.pop %v446
        %v449 = vmul.f32 1.0, %v448
        %v450 = vrcp.pop %v447
        %v451 = vmul.f32 1.0, %v450
        %v452 = vmul.f32 %v419, %v449
        %v453 = vmul.f32 %v420, %v451
        %v456 = vrot.slane %v452, 4
        %v457 = vrot.slane %v453, 4
        %v460 = vsub.f32 %v452, %v456
        %v461 = vsub.f32 %v453, %v457
        %v462 = vand.u32 2147483647, %v460
        %v463 = vand.u32 2147483647, %v461
        %vm464 = vcmask 1043456
        %v465 = vsel %vm464, %v462, 0.0
        %v466 = vsel %vm464, %v463, 0.0
        %v467 = vadd.f32 %v465, %v466
        %468 = vadd.xlane.f32.xlu0 %v467
        %v469 = vpop.xlane.xlu0 %468
        %v470 = vmul.f32 %v469, %v192
        %v471 = vsub.f32 %v462, %v470
        %v472 = vsub.f32 %v463, %v470
        %v473 = vmul.f32 %v471, %v471
        %v474 = vmul.f32 %v472, %v472
        %v475 = vsel %vm464, %v473, 0.0
        %v476 = vsel %vm464, %v474, 0.0
        %v477 = vadd.f32 %v475, %v476
        %478 = vadd.xlane.f32.xlu0 %v477
        %v479 = vpop.xlane.xlu0 %478
        %v480 = vmul.f32 %v479, %v201
        %v481 = vadd.f32 %v480, 0.0001
        %v482 = vmul.f32 %v481, 4.0
        %v483 = vrcp.pop %v482
        %v484 = vmul.f32 %v473, %v483
        %v485 = vmul.f32 %v474, %v483
        %v486 = vadd.f32 %v484, 0.5
        %v487 = vadd.f32 %v485, 0.5
        %v488 = vxor.u32 %v486, 2147483648
        %v489 = vxor.u32 %v487, 2147483648
        %v490 = vmul.f32 %v488, 1.442695
        %v491 = vpow.pop %v490
        %v492 = vmul.f32 %v489, 1.442695
        %v493 = vpow.pop %v492
        %v494 = vadd.f32 %v491, 1.0
        %v495 = vadd.f32 %v493, 1.0
        %v496 = vrcp.pop %v494
        %v497 = vmul.f32 1.0, %v496
        %v498 = vrcp.pop %v495
        %v499 = vmul.f32 1.0, %v498
        %v500 = vmul.f32 %v462, %v497
        %v501 = vmul.f32 %v463, %v499
        %v504 = vcombine.low %v500, %v501
        %506 = vst [vmem:[%s186] sm:$0xff] %v504
        %s507 = sand.u32 %s96, 1
        %s508 = scalar_lea.sflag [#allocation4], %s507
        %s509 = sand.u32 %s96, 1
        %s510 = smul.addr %s509, 8
        %s511 = scalar_lea.vmem [#allocation5], %s510
        // Predicated region
        $region37: #{tpu_custom_call.1} parent=31 // pred_check
          %p512 = pneg %p106
        $region38: #{tpu_custom_call.1} parent=31 // pred_check_branch
          %514 = sbr.rel (%p512) target = $region40
        $region39: #{tpu_custom_call.1} parent=31 // pred_region
          %s516 = ssub.s32 128, 128
          %517 = vsyncadd %s508, %s516
          %s518 = smul.addr %s20, 2
          %s519 = smul.addr %s518, 64
          %s520 = scalar_lea.hbm %s3, %s519
          %s522 = sshll.u32 %s511, 4
          %s523 = int_to_ptr.vmem [resolvable:$true] %s522
          %525 = dma.vmem_to_hbm [thread:$0]  %s523, 128, %s520, %s508
        $region40: #{tpu_custom_call.1} parent=31 // pred_fallthru
          _
      $region32: #{tpu_custom_call.1} parent=5 // pred_fallthru
        _
      %p526 = scmp.le.s32.totalorder 2, %s15
      // Predicated region
      $region41: #{tpu_custom_call.1} parent=5 // pred_check
        %p527 = pneg %p526
      $region42: #{tpu_custom_call.1} parent=5 // pred_check_branch
        %529 = sbr.rel (%p527) target = $region44
      $region43: #{tpu_custom_call.1} parent=5 // pred_region
        %s530 = ssub.s32 %s15, 2
        // Predicated region
        $region45: #{tpu_custom_call.1} parent=43 // pred_check
          %p531 = pneg %p112
        $region46: #{tpu_custom_call.1} parent=43 // pred_check_branch
          %533 = sbr.rel (%p531) target = $region48
        $region47: #{tpu_custom_call.1} parent=43 // pred_region
          %s534 = sand.u32 %s97, 1
          %s535 = scalar_lea.sflag [#allocation4], %s534
          %s536 = sand.u32 %s97, 1
          %s537 = smul.addr %s536, 8
          %s538 = scalar_lea.vmem [#allocation5], %s537
          %539 = dma.done %s535, 128
        $region48: #{tpu_custom_call.1} parent=43 // pred_fallthru
          _
      $region44: #{tpu_custom_call.1} parent=5 // pred_fallthru
        _
    $region6: #{tpu_custom_call.1} parent=1 // loop_footer
      %s19 = sadd.s32 1, %s15
    $region7: #{tpu_custom_call.1} parent=1 // loop_footer_branch
      %14 = sbr.rel target = $region3
    $region8: #{tpu_custom_call.1} parent=1 // loop_exit
      _
    %540 = vsyncpa [#allocation3], 1
    %s541 = scalar_lea.sflag [#allocation3], 1
    %542 = vsyncpa %s541, 1
    %543 = vsyncpa [#allocation4], 1
    %s544 = scalar_lea.sflag [#allocation4], 1
    %545 = vsyncpa %s544, 1

</llo_original>
